<compile_context>
chip_gen: v6e
topology: v6e:2x2x1
jax: 0.10.0
libtpu: 0.0.40
codegen_flags: <defaults>
</compile_context>

<pallas_src>
import functools

import jax
import jax.numpy as jnp
from jax import lax
from jax.experimental import pallas as pl
from jax.experimental.pallas import tpu as pltpu


def _round_up(x, m):
    return ((x + m - 1) // m) * m


def _sum_edges_kernel(ids_ref, feat_ref, out_ref, acc_ref, *,
                      num_edges, needs_mask):
    """Segment-sum of edge features into per-graph rows.

    Grid: (num_feat_tiles, num_edge_tiles); edge axis is the reduction.
    ids_ref : (1, TE)  int32  -- graph id of each edge in this tile (lane-major)
    feat_ref: (TE, TD) float  -- edge-feature tile
    out_ref : (B, TD)  float  -- per-graph readout (written on last edge step)
    acc_ref : (B, TD)  f32    -- VMEM accumulator, resident across edge tiles
    """
    e_step = pl.program_id(1)
    n_e = pl.num_programs(1)
    te = feat_ref.shape[0]
    b = acc_ref.shape[0]

    feat = feat_ref[...]
    if needs_mask:
        # Static E: this branch only exists when E % TE != 0.  Rows past E in
        # the last (partial) tile may contain garbage -> zero them so they
        # contribute nothing (and garbage ids cannot alias a real graph).
        row = lax.broadcasted_iota(jnp.int32, (te, 1), 0) + e_step * te
        feat = jnp.where(row < num_edges, feat, jnp.zeros_like(feat))

    # Lane-dense (B, TE) one-hot membership in the feature dtype (0/1 exact
    # in bf16).  Natural-orientation MXU contraction (B,TE) x (TE,TD).
    ids = ids_ref[...]                                        # (1, TE) int32
    graph_iota = lax.broadcasted_iota(jnp.int32, (b, te), 0)  # (B, TE)
    onehot = (ids == graph_iota).astype(feat.dtype)

    contrib = lax.dot_general(
        onehot,
        feat,
        dimension_numbers=(((1,), (0,)), ((), ())),
        preferred_element_type=jnp.float32,
    )                                                         # (B, TD) f32

    @pl.when(e_step == 0)
    def _():
        acc_ref[...] = contrib

    @pl.when(e_step != 0)
    def _():
        acc_ref[...] += contrib

    @pl.when(e_step == n_e - 1)
    def _():
        out_ref[...] = acc_ref[...].astype(out_ref.dtype)


@functools.partial(
    jax.jit, static_argnames=("num_graphs", "edge_tile_bytes", "feat_tile")
)
def sum_pooling_edges(edge_graph_ids, feat, *, num_graphs,
                      edge_tile_bytes=2 << 20, feat_tile=512):
    """Pallas equivalent of dgl.sum_edges(graph, 'e').

    edge_graph_ids: int  [E]    -- which graph each edge belongs to
    feat:           float[E, D] -- edge features (f32 or bf16)
    returns:        float[num_graphs, D]
    """
    E, D = feat.shape
    ids = edge_graph_ids.astype(jnp.int32).reshape(1, E)   # lane-major ids
    itemsize = jnp.dtype(feat.dtype).itemsize

    # ---- feature tile (parallel axis; v7x megacore splits it) --------------
    if D % 128 == 0:
        max_td = max(128, (int(feat_tile) // 128) * 128)
        if D >= 256:
            # keep >= 2 feature tiles so both v7x TensorCores get work
            max_td = min(max_td, (D // 2) // 128 * 128)
        td = 128
        cand = 256
        while cand <= max_td:
            if D % cand == 0:
                td = cand
            cand += 128
    else:
        # TODO(synk): pad D once to a multiple of 128 instead of an untiled
        # lane dim (rare; only hit for D not divisible by 128).
        td = D

    # ---- edge tile (reduction axis): ~edge_tile_bytes moved per grid step --
    te = _round_up(max(1, edge_tile_bytes // max(1, td * itemsize)), 256)
    te = max(256, min(te, 2048))
    if te >= E:
        te = E              # single full-extent edge block, no masking needed
    needs_mask = (E % te) != 0

    num_e_tiles = pl.cdiv(E, te)
    grid = (D // td, num_e_tiles)

    cost = pl.CostEstimate(
        flops=2 * num_e_tiles * te * num_graphs * D,
        transcendentals=0,
        bytes_accessed=E * D * itemsize + E * 4 + num_graphs * D * itemsize,
    )

    # Explicit VMEM budget: double-buffered inputs/outputs + resident f32
    # accumulator + one-hot temp. Cap at 48 MiB (headroom under v7x's 64 MiB).
    b_pad = _round_up(num_graphs, 8)
    te_pad = _round_up(te, 128)
    vmem_bytes = (
        2 * te_pad * td * itemsize        # feat double buffer
        + 2 * 8 * te_pad * 4              # ids double buffer (sublane-padded)
        + b_pad * td * 4                  # f32 accumulator scratch
        + 2 * b_pad * td * itemsize       # output double buffer
        + b_pad * te_pad * itemsize       # one-hot temp
    )
    vmem_limit = int(min(max(32 << 20, 2 * vmem_bytes), 48 << 20))

    kernel = functools.partial(
        _sum_edges_kernel, num_edges=E, needs_mask=needs_mask)

    return pl.pallas_call(
        kernel,
        out_shape=jax.ShapeDtypeStruct((num_graphs, D), feat.dtype),
        grid_spec=pltpu.PrefetchScalarGridSpec(
            num_scalar_prefetch=0,
            grid=grid,
            in_specs=[
                pl.BlockSpec((1, te), lambda d, e: (0, e)),    # edge graph ids
                pl.BlockSpec((te, td), lambda d, e: (e, d)),   # edge features
            ],
            out_specs=pl.BlockSpec((num_graphs, td), lambda d, e: (0, d)),
            scratch_shapes=[pltpu.VMEM((num_graphs, td), jnp.float32)],
        ),
        compiler_params=pltpu.CompilerParams(
            dimension_semantics=("parallel", "arbitrary"),
            vmem_limit_bytes=vmem_limit,
        ),
        cost_estimate=cost,
    )(ids, feat)


if __name__ == "__main__":
    key = jax.random.PRNGKey(0)

    # --- Test 1: small batched graph, edge count a tile multiple ------------
    batch_num_edges = [96, 160]            # B graphs, sum = 256 edges
    B = len(batch_num_edges)
    E = sum(batch_num_edges)
    D = 128

    edge_graph_ids = jnp.concatenate(
        [jnp.full((n,), g, dtype=jnp.int32)
         for g, n in enumerate(batch_num_edges)]
    )
    feat = jax.random.normal(key, (E, D), dtype=jnp.float32)

    out = sum_pooling_edges(edge_graph_ids, feat, num_graphs=B)
    out = jax.block_until_ready(out)
    ref = jax.ops.segment_sum(feat, edge_graph_ids, num_segments=B)
    assert out.shape == (B, D)
    assert jnp.allclose(out, ref, atol=1e-4, rtol=1e-4)

    # --- Test 2: ragged edge count -> exercises multi-step + in-kernel mask -
    batch_num_edges2 = [300, 420]          # sum = 720 (not a multiple of 256)
    B2 = len(batch_num_edges2)
    E2 = sum(batch_num_edges2)
    edge_graph_ids2 = jnp.concatenate(
        [jnp.full((n,), g, dtype=jnp.int32)
         for g, n in enumerate(batch_num_edges2)]
    )
    feat2 = jax.random.normal(jax.random.PRNGKey(1), (E2, D), dtype=jnp.float32)

    # Force a small edge tile (256) so the grid has several reduction steps
    # and the last tile is partial.
    out2 = sum_pooling_edges(edge_graph_ids2, feat2, num_graphs=B2,
                             edge_tile_bytes=256 * D * 4)
    out2 = jax.block_until_ready(out2)
    ref2 = jax.ops.segment_sum(feat2, edge_graph_ids2, num_segments=B2)
    assert out2.shape == (B2, D)
    assert jnp.allclose(out2, ref2, atol=1e-4, rtol=1e-4)

    print("KERNEL_OK")
</pallas_src>

<mosaic_0001>
module attributes {stable_mosaic.version = 11 : i64} {
  func.func @_sum_edges_kernel(%arg0: i32, %arg1: i32, %arg2: memref<1x256xi32, #tpu.memory_space<vmem>>, %arg3: memref<256x128xf32, #tpu.memory_space<vmem>>, %arg4: memref<2x128xf32, #tpu.memory_space<vmem>>, %arg5: memref<2x128xf32, #tpu.memory_space<vmem>>) attributes {dimension_semantics = [#tpu.dimension_semantics<parallel>, #tpu.dimension_semantics<arbitrary>], iteration_bounds = array<i64: 1, 1>, scalar_prefetch = 0 : i64, scratch_operands = 1 : i64, tpu.core_type = #tpu.core_type<tc>, window_params = [{transform_indices = @transform_0, window_bounds = array<i64: 1, 256>}, {transform_indices = @transform_1, window_bounds = array<i64: 256, 128>}, {transform_indices = @transform_2, window_bounds = array<i64: 2, 128>}]} {
    %c0 = arith.constant 0 : index
    %c0_0 = arith.constant 0 : index
    %0 = vector.load %arg3[%c0, %c0_0] : memref<256x128xf32, #tpu.memory_space<vmem>>, vector<256x128xf32>
    %c0_1 = arith.constant 0 : index
    %c0_2 = arith.constant 0 : index
    %1 = vector.load %arg2[%c0_1, %c0_2] : memref<1x256xi32, #tpu.memory_space<vmem>>, vector<1x256xi32>
    %2 = tpu.iota {dimensions = array<i32: 0>} : vector<2x256xi32>
    %3 = vector.broadcast %1 : vector<1x256xi32> to vector<2x256xi32>
    %4 = arith.cmpi eq, %3, %2 : vector<2x256xi32>
    %5 = arith.extui %4 : vector<2x256xi1> to vector<2x256xi32>
    %6 = arith.sitofp %5 : vector<2x256xi32> to vector<2x256xf32>
    %cst = arith.constant dense<0.000000e+00> : vector<2x128xf32>
    %7 = tpu.matmul %6, %0, %cst {dimension_numbers = #tpu.dot_dimension_numbers<[1], [0], [0], [1], [0, 0, 1, 1], [], []>} : vector<2x256xf32>, vector<256x128xf32>, vector<2x128xf32> -> vector<2x128xf32>
    %c0_i32 = arith.constant 0 : i32
    %8 = arith.cmpi eq, %arg1, %c0_i32 : i32
    %9 = arith.extui %8 : i1 to i32
    %c0_i32_3 = arith.constant 0 : i32
    %10 = arith.cmpi ne, %9, %c0_i32_3 : i32
    scf.if %10 {
      %c0_8 = arith.constant 0 : index
      %c0_9 = arith.constant 0 : index
      %17 = vector.load %arg5[%c0_8, %c0_9] : memref<2x128xf32, #tpu.memory_space<vmem>>, vector<2x128xf32>
      tpu.vector_store %arg5[%c0_8, %c0_9], %7 {strides = array<i32>} : memref<2x128xf32, #tpu.memory_space<vmem>>, vector<2x128xf32>,
    } else {
    }
    %c0_i32_4 = arith.constant 0 : i32
    %11 = arith.cmpi ne, %arg1, %c0_i32_4 : i32
    %12 = arith.extui %11 : i1 to i32
    %c0_i32_5 = arith.constant 0 : i32
    %13 = arith.cmpi ne, %12, %c0_i32_5 : i32
    scf.if %13 {
      %c0_8 = arith.constant 0 : index
      %c0_9 = arith.constant 0 : index
      %17 = vector.load %arg5[%c0_8, %c0_9] : memref<2x128xf32, #tpu.memory_space<vmem>>, vector<2x128xf32>
      %18 = arith.addf %17, %7 : vector<2x128xf32>
      %c0_10 = arith.constant 0 : index
      %c0_11 = arith.constant 0 : index
      %19 = vector.load %arg5[%c0_10, %c0_11] : memref<2x128xf32, #tpu.memory_space<vmem>>, vector<2x128xf32>
      tpu.vector_store %arg5[%c0_10, %c0_11], %18 {strides = array<i32>} : memref<2x128xf32, #tpu.memory_space<vmem>>, vector<2x128xf32>,
    } else {
    }
    %c0_i32_6 = arith.constant 0 : i32
    %14 = arith.cmpi eq, %arg1, %c0_i32_6 : i32
    %15 = arith.extui %14 : i1 to i32
    %c0_i32_7 = arith.constant 0 : i32
    %16 = arith.cmpi ne, %15, %c0_i32_7 : i32
    scf.if %16 {
      %c0_8 = arith.constant 0 : index
      %c0_9 = arith.constant 0 : index
      %17 = vector.load %arg5[%c0_8, %c0_9] : memref<2x128xf32, #tpu.memory_space<vmem>>, vector<2x128xf32>
      %c0_10 = arith.constant 0 : index
      %c0_11 = arith.constant 0 : index
      %18 = vector.load %arg4[%c0_10, %c0_11] : memref<2x128xf32, #tpu.memory_space<vmem>>, vector<2x128xf32>
      tpu.vector_store %arg4[%c0_10, %c0_11], %17 {strides = array<i32>} : memref<2x128xf32, #tpu.memory_space<vmem>>, vector<2x128xf32>,
    } else {
    }
    return
  }
  func.func @transform_0(%arg0: i32, %arg1: i32) -> (i32, i32) {
    %c0_i32 = arith.constant 0 : i32
    %c0_i32_0 = arith.constant 0 : i32
    return %c0_i32, %arg1 : i32, i32
  }
  func.func @transform_1(%arg0: i32, %arg1: i32) -> (i32, i32) {
    %c0_i32 = arith.constant 0 : i32
    return %arg1, %arg0 : i32, i32
  }
  func.func @transform_2(%arg0: i32, %arg1: i32) -> (i32, i32) {
    %c0_i32 = arith.constant 0 : i32
    %c0_i32_0 = arith.constant 0 : i32
    return %c0_i32, %arg0 : i32, i32
  }
}

</mosaic_0001>

<llo_original>
// kernel: sum_pooling_edges.1
$region0: #{sum_pooling_edges.1}
  #allocation0 [shape = 'u32[]', space=smem, size = 0x4, offset = 0x4, fixed_abs, tag = 'smem constant byte address 0x4 - core index']
  #allocation1 [shape = 'u32[144,128]{1,0:T(1,128)}', space=vmem, size = 0x12000, scoped, tag = 'internal scratch']
  #allocation2 [shape = 'f32[2,128]{1,0:T(2,128)}', space=vmem, size = 0x400, scoped, tag = 'scratch operand']
  %s0 = inlined_call_operand.hbm [shape: s32[1,256], index: 0, kind: input, shape index: {}]
  %s1 = inlined_call_operand.hbm [shape: f32[256,128], index: 1, kind: input, shape index: {}]
  %s2 = inlined_call_operand.hbm [shape: f32[2,128], index: 2, kind: output, shape index: {}]
  %s3 = sld [smem:[#allocation0]]
  $region38: #{sum_pooling_edges.1} parent=0
    _
  %s5 = ssub.s32 1, %s3
  %s6 = scalar_select 0, %s5, %s3
  $region1: #{sum_pooling_edges.1} parent=0
    #allocation3 [shape = 'u8[1024]{0}', space=vmem, size = 0x400, scoped, tag = 'input window, operand 0, single buffered']
    #allocation4 [shape = 's32[1]{0}', space=sflag, size = 0x4, scoped, tag = 'scoped memory for sum_pooling_edges.1']
    #allocation5 [shape = 's32[1]{0}', space=sflag, size = 0x4, scoped, tag = 'scoped memory for sum_pooling_edges.1']
    #allocation6 [shape = 'u8[131072]{0}', space=vmem, size = 0x20000, scoped, tag = 'input window, operand 1, single buffered']
    #allocation7 [shape = 's32[1]{0}', space=sflag, size = 0x4, scoped, tag = 'scoped memory for sum_pooling_edges.1']
    #allocation8 [shape = 'u8[1024]{0}', space=vmem, size = 0x400, scoped, tag = 'output window, operand 0, single buffered']
    %7 = vsyncpa [#allocation4], 0
    %8 = vsyncpa [#allocation7], 0
    %9 = vsyncpa [#allocation5], 0
    // Predicated region
    $region2: #{sum_pooling_edges.1} parent=1 // pred_check
      _
    $region3: #{sum_pooling_edges.1} parent=1 // pred_check_branch
      %11 = sbr.rel (0) target = $region5
    $region4: #{sum_pooling_edges.1} parent=1 // pred_region
      %s13 = ssub.s32 32, 32
      %14 = vsyncadd [#allocation4], %s13
      %s16 = sshll.u32 [#allocation3], 4
      %s17 = int_to_ptr.vmem [resolvable:$true] %s16
      %19 = dma.hbm_to_vmem [thread:$0]  %s0, 32, %s17, [#allocation4]
    $region5: #{sum_pooling_edges.1} parent=1 // pred_fallthru
      _
    // Predicated region
    $region6: #{sum_pooling_edges.1} parent=1 // pred_check
      _
    $region7: #{sum_pooling_edges.1} parent=1 // pred_check_branch
      %21 = sbr.rel (0) target = $region9
    $region8: #{sum_pooling_edges.1} parent=1 // pred_region
      %s23 = ssub.s32 4096, 4096
      %24 = vsyncadd [#allocation7], %s23
      %s25 = sshll.u32 [#allocation6], 4
      %s26 = int_to_ptr.vmem [resolvable:$true] %s25
      %31 = dma.hbm_to_vmem [thread:$0]  %s1, 4096, %s26, [#allocation7], 128, 128, 8
    $region9: #{sum_pooling_edges.1} parent=1 // pred_fallthru
      _
    // Predicated region
    $region10: #{sum_pooling_edges.1} parent=1 // pred_check
      _
    $region11: #{sum_pooling_edges.1} parent=1 // pred_check_branch
      %33 = sbr.rel (0) target = $region13
    $region12: #{sum_pooling_edges.1} parent=1 // pred_region
      %34 = dma.done [#allocation4], 32
    $region13: #{sum_pooling_edges.1} parent=1 // pred_fallthru
      _
    // Predicated region
    $region14: #{sum_pooling_edges.1} parent=1 // pred_check
      _
    $region15: #{sum_pooling_edges.1} parent=1 // pred_check_branch
      %36 = sbr.rel (0) target = $region17
    $region16: #{sum_pooling_edges.1} parent=1 // pred_region
      %37 = dma.done [#allocation7], 4096
    $region17: #{sum_pooling_edges.1} parent=1 // pred_fallthru
      _
    %v38 = vld [vmem:[#allocation6] sm:$0xff]
    %v39 = vld [vmem:[#allocation6 + $0x8] sm:$0xff]
    %v40 = vld [vmem:[#allocation6 + $0x10] sm:$0xff]
    %v41 = vld [vmem:[#allocation6 + $0x18] sm:$0xff]
    %v42 = vld [vmem:[#allocation6 + $0x20] sm:$0xff]
    %v43 = vld [vmem:[#allocation6 + $0x28] sm:$0xff]
    %v44 = vld [vmem:[#allocation6 + $0x30] sm:$0xff]
    %v45 = vld [vmem:[#allocation6 + $0x38] sm:$0xff]
    %v46 = vld [vmem:[#allocation6 + $0x40] sm:$0xff]
    %v47 = vld [vmem:[#allocation6 + $0x48] sm:$0xff]
    %v48 = vld [vmem:[#allocation6 + $0x50] sm:$0xff]
    %v49 = vld [vmem:[#allocation6 + $0x58] sm:$0xff]
    %v50 = vld [vmem:[#allocation6 + $0x60] sm:$0xff]
    %v51 = vld [vmem:[#allocation6 + $0x68] sm:$0xff]
    %v52 = vld [vmem:[#allocation6 + $0x70] sm:$0xff]
    %v53 = vld [vmem:[#allocation6 + $0x78] sm:$0xff]
    %v54 = vld [vmem:[#allocation6 + $0x80] sm:$0xff]
    %v55 = vld [vmem:[#allocation6 + $0x88] sm:$0xff]
    %v56 = vld [vmem:[#allocation6 + $0x90] sm:$0xff]
    %v57 = vld [vmem:[#allocation6 + $0x98] sm:$0xff]
    %v58 = vld [vmem:[#allocation6 + $0xa0] sm:$0xff]
    %v59 = vld [vmem:[#allocation6 + $0xa8] sm:$0xff]
    %v60 = vld [vmem:[#allocation6 + $0xb0] sm:$0xff]
    %v61 = vld [vmem:[#allocation6 + $0xb8] sm:$0xff]
    %v62 = vld [vmem:[#allocation6 + $0xc0] sm:$0xff]
    %v63 = vld [vmem:[#allocation6 + $0xc8] sm:$0xff]
    %v64 = vld [vmem:[#allocation6 + $0xd0] sm:$0xff]
    %v65 = vld [vmem:[#allocation6 + $0xd8] sm:$0xff]
    %v66 = vld [vmem:[#allocation6 + $0xe0] sm:$0xff]
    %v67 = vld [vmem:[#allocation6 + $0xe8] sm:$0xff]
    %v68 = vld [vmem:[#allocation6 + $0xf0] sm:$0xff]
    %v69 = vld [vmem:[#allocation6 + $0xf8] sm:$0xff]
    %v70 = vld [vmem:[#allocation3] sm:$0x3]
    %v71 = vlaneseq
    %v72 = vshrl.u32 %v71, 7
    %v73 = vlaneseq
    %v74 = vshrl.u32 %v73, 7
    %v75 = vsub.s32 0, %v74
    %v76 = vrot.slane %v70, %v75
    %v77 = vlaneseq
    %v78 = vshrl.u32 %v77, 7
    %v79 = vsub.s32 1, %v78
    %v80 = vrot.slane %v70, %v79
    %vm81 = vcmp.eq.s32.totalorder %v76, %v72
    %vm82 = vcmp.eq.s32.totalorder %v80, %v72
    %v83 = vsel %vm81, 1, 0
    %v84 = vsel %vm82, 1, 0
    %v85 = vcvt.s32.f32 %v83
    %v86 = vcvt.s32.f32 %v84
    %87 = vmatprep.subr.mxu0 0.0
    %88 = vmatpush1.msra.mxu0 %v53
    %89 = vmatprep.subr.mxu0 0.0
    %90 = vmatpush1.msra.mxu0 %v52
    %91 = vmatprep.subr.mxu0 0.0
    %92 = vmatpush1.msra.mxu0 %v51
    %93 = vmatprep.subr.mxu0 0.0
    %94 = vmatpush1.msra.mxu0 %v50
    %95 = vmatprep.subr.mxu0 0.0
    %96 = vmatpush1.msra.mxu0 %v49
    %97 = vmatprep.subr.mxu0 0.0
    %98 = vmatpush1.msra.mxu0 %v48
    %99 = vmatprep.subr.mxu0 0.0
    %100 = vmatpush1.msra.mxu0 %v47
    %101 = vmatprep.subr.mxu0 0.0
    %102 = vmatpush1.msra.mxu0 %v46
    %103 = vmatprep.subr.mxu0 0.0
    %104 = vmatpush1.msra.mxu0 %v45
    %105 = vmatprep.subr.mxu0 0.0
    %106 = vmatpush1.msra.mxu0 %v44
    %107 = vmatprep.subr.mxu0 0.0
    %108 = vmatpush1.msra.mxu0 %v43
    %109 = vmatprep.subr.mxu0 0.0
    %110 = vmatpush1.msra.mxu0 %v42
    %111 = vmatprep.subr.mxu0 0.0
    %112 = vmatpush1.msra.mxu0 %v41
    %113 = vmatprep.subr.mxu0 0.0
    %114 = vmatpush1.msra.mxu0 %v40
    %115 = vmatprep.subr.mxu0 0.0
    %116 = vmatpush1.msra.mxu0 %v39
    %117 = vmatprep.subr.mxu0 0.0
    %118 = vmatpush1.msra.mxu0 %v38
    %119 = vmatprep.subr.mxu0 0.0
    %120 = vmatpush2.msra.mxu0 %v69
    %121 = vmatprep.subr.mxu0 0.0
    %122 = vmatpush2.msra.mxu0 %v68
    %123 = vmatprep.subr.mxu0 0.0
    %124 = vmatpush2.msra.mxu0 %v67
    %125 = vmatprep.subr.mxu0 0.0
    %126 = vmatpush2.msra.mxu0 %v66
    %127 = vmatprep.subr.mxu0 0.0
    %128 = vmatpush2.msra.mxu0 %v65
    %129 = vmatprep.subr.mxu0 0.0
    %130 = vmatpush2.msra.mxu0 %v64
    %131 = vmatprep.subr.mxu0 0.0
    %132 = vmatpush2.msra.mxu0 %v63
    %133 = vmatprep.subr.mxu0 0.0
    %134 = vmatpush2.msra.mxu0 %v62
    %135 = vmatprep.subr.mxu0 0.0
    %136 = vmatpush2.msra.mxu0 %v61
    %137 = vmatprep.subr.mxu0 0.0
    %138 = vmatpush2.msra.mxu0 %v60
    %139 = vmatprep.subr.mxu0 0.0
    %140 = vmatpush2.msra.mxu0 %v59
    %141 = vmatprep.subr.mxu0 0.0
    %142 = vmatpush2.msra.mxu0 %v58
    %143 = vmatprep.subr.mxu0 0.0
    %144 = vmatpush2.msra.mxu0 %v57
    %145 = vmatprep.subr.mxu0 0.0
    %146 = vmatpush2.msra.mxu0 %v56
    %147 = vmatprep.subr.mxu0 0.0
    %148 = vmatpush2.msra.mxu0 %v55
    %149 = vmatprep.subr.mxu0 0.0
    %150 = vmatpush2.msra.mxu0 %v54
    %151 = vmatprep.mubr.f32.mxu0 %v86
    %152 = vmatmul.mubr.f32.gmra.mxu0 %v85
    %v153 = vpop.f32.mrf.mxu0
    %v154 = vadd.f32 0.0, %v153
    %v155 = vpop.f32.mrf.mxu0
    %156 = vdwg.mxu0
    %p157 = scmp.eq.s32.totalorder 0, 0
    // Predicated region
    $region18: #{sum_pooling_edges.1} parent=1 // pred_check
      %p158 = pneg %p157
    $region19: #{sum_pooling_edges.1} parent=1 // pred_check_branch
      %160 = sbr.rel (%p158) target = $region21
    $region20: #{sum_pooling_edges.1} parent=1 // pred_region
      %161 = vst [vmem:[#allocation2] sm:$0x3] %v154
    $region21: #{sum_pooling_edges.1} parent=1 // pred_fallthru
      _
    %p162 = scmp.ne.s32.totalorder 0, 0
    // Predicated region
    $region22: #{sum_pooling_edges.1} parent=1 // pred_check
      %p163 = pneg %p162
    $region23: #{sum_pooling_edges.1} parent=1 // pred_check_branch
      %165 = sbr.rel (%p163) target = $region25
    $region24: #{sum_pooling_edges.1} parent=1 // pred_region
      %v166 = vld [vmem:[#allocation2] sm:$0x3]
      %v167 = vadd.f32 %v166, %v154
      %168 = vst [vmem:[#allocation2] sm:$0x3] %v167
    $region25: #{sum_pooling_edges.1} parent=1 // pred_fallthru
      _
    // Predicated region
    $region26: #{sum_pooling_edges.1} parent=1 // pred_check
      %p169 = pneg %p157
    $region27: #{sum_pooling_edges.1} parent=1 // pred_check_branch
      %171 = sbr.rel (%p169) target = $region29
    $region28: #{sum_pooling_edges.1} parent=1 // pred_region
      %v172 = vld [vmem:[#allocation2] sm:$0x3]
      %173 = vst [vmem:[#allocation8] sm:$0x3] %v172
    $region29: #{sum_pooling_edges.1} parent=1 // pred_fallthru
      _
    // Predicated region
    $region30: #{sum_pooling_edges.1} parent=1 // pred_check
      _
    $region31: #{sum_pooling_edges.1} parent=1 // pred_check_branch
      %175 = sbr.rel (0) target = $region33
    $region32: #{sum_pooling_edges.1} parent=1 // pred_region
      %s177 = ssub.s32 32, 32
      %178 = vsyncadd [#allocation5], %s177
      %s180 = sshll.u32 [#allocation8], 4
      %s181 = int_to_ptr.vmem [resolvable:$true] %s180
      %183 = dma.vmem_to_hbm [thread:$0]  %s181, 32, %s2, [#allocation5]
    $region33: #{sum_pooling_edges.1} parent=1 // pred_fallthru
      _
    // Predicated region
    $region34: #{sum_pooling_edges.1} parent=1 // pred_check
      _
    $region35: #{sum_pooling_edges.1} parent=1 // pred_check_branch
      %185 = sbr.rel (0) target = $region37
    $region36: #{sum_pooling_edges.1} parent=1 // pred_region
      %186 = dma.done [#allocation5], 32
    $region37: #{sum_pooling_edges.1} parent=1 // pred_fallthru
      _
    %187 = vsyncpa [#allocation4], 1
    %188 = vsyncpa [#allocation7], 1
    %189 = vsyncpa [#allocation5], 1

</llo_original>
